<compile_context>
chip_gen: v7x
topology: tpu7x:2x2x1
jax: 0.10.0
libtpu: 0.0.40
codegen_flags: <defaults>
</compile_context>

<pallas_src>
import jax
import jax.numpy as jnp
from jax.experimental import pallas as pl
from jax.experimental.pallas import tpu as pltpu


def _round_up(x, m):
    return (x + m - 1) // m * m


def esm_classifier_kernel(x_ref, wc_ref, bc_ref, out_ref):
    # Cast x block to the compute dtype (bf16) on the VPU; f32 accumulate on
    # the MXU; bias add in f32 post-accumulate.
    x = x_ref[...].astype(wc_ref.dtype)
    out = jnp.dot(x, wc_ref[...], preferred_element_type=jnp.float32) + bc_ref[...]
    out_ref[...] = out.astype(out_ref.dtype)


def esm_classifier(x, w1, b1, w2, b2, *, block_m=512,
                   compute_dtype=jnp.bfloat16, out_dtype=None):
    """x: (B, E); w1: (E, E); b1: (E,); w2: (E, n_cls); b2: (n_cls,) -> (B, n_cls).

    Weights are stored pre-transposed as (in_features, out_features) so the
    PyTorch forward y = x @ W.T + b is y = x @ w + b here.
    """
    B, E = x.shape
    n_cls = w2.shape[1]

    # ---- fold the two affine layers (no nonlinearity between them) --------
    wc = w1.astype(jnp.float32) @ w2.astype(jnp.float32)            # (E, n_cls)
    bc = b1.astype(jnp.float32) @ w2.astype(jnp.float32) + b2.astype(jnp.float32)

    # ---- lane-dense classifier head: pad n_cls -> multiple of 128 ---------
    n_pad = _round_up(max(n_cls, 128), 128)
    wc_p = jnp.pad(wc, ((0, 0), (0, n_pad - n_cls))).astype(compute_dtype)
    bc_p = jnp.pad(bc, (0, n_pad - n_cls)).reshape(1, n_pad).astype(jnp.float32)

    # ---- batch tiling ------------------------------------------------------
    rb = _round_up(B, 8)
    bm = min(block_m, rb)
    if rb > 8:
        # Guarantee >= 2 grid steps when the batch is splittable, so both of
        # v7x's TensorCores get work (harmless on single-TC v5e/v6e).
        bm = min(bm, max(_round_up(pl.cdiv(rb, 2), 8), 8))
    b_pad = _round_up(B, bm)
    # Pad only (no dtype cast) -- avoids an extra full HBM pass over x.
    x_p = x if b_pad == B else jnp.pad(x, ((0, b_pad - B), (0, 0)))

    if out_dtype is None:
        out_dtype = x.dtype

    cost = pl.CostEstimate(
        flops=2 * b_pad * E * n_pad,
        transcendentals=0,
        bytes_accessed=(x_p.size * x_p.dtype.itemsize
                        + wc_p.size * wc_p.dtype.itemsize
                        + bc_p.size * bc_p.dtype.itemsize
                        + b_pad * n_pad * jnp.dtype(out_dtype).itemsize),
    )

    out_padded = pl.pallas_call(
        esm_classifier_kernel,
        out_shape=jax.ShapeDtypeStruct((b_pad, n_pad), out_dtype),
        grid=(b_pad // bm,),
        in_specs=[
            pl.BlockSpec((bm, E), lambda i: (i, 0)),      # x rows (tiled over batch)
            pl.BlockSpec((E, n_pad), lambda i: (0, 0)),   # folded weight (VMEM-resident)
            pl.BlockSpec((1, n_pad), lambda i: (0, 0)),   # folded bias (VMEM-resident)
        ],
        out_specs=pl.BlockSpec((bm, n_pad), lambda i: (i, 0)),
        compiler_params=pltpu.CompilerParams(
            dimension_semantics=("parallel",)),
        cost_estimate=cost,
    )(x_p, wc_p, bc_p)

    # Slice away the batch padding and the padded lanes of the head.
    return out_padded[:B, :n_cls].astype(x.dtype)


if __name__ == "__main__":
    embed_size = 128   # EsmClassifier default
    batch = 8
    n_cls = 2

    key = jax.random.PRNGKey(0)
    kx, kw1, kb1, kw2, kb2 = jax.random.split(key, 5)

    x = jax.random.normal(kx, (batch, embed_size), dtype=jnp.float32)
    # Deterministic synthetic parameters (already transposed to (in, out)).
    w1 = jax.random.normal(kw1, (embed_size, embed_size), dtype=jnp.float32) * 0.05
    b1 = jax.random.normal(kb1, (embed_size,), dtype=jnp.float32) * 0.05
    w2 = jax.random.normal(kw2, (embed_size, n_cls), dtype=jnp.float32) * 0.05
    b2 = jax.random.normal(kb2, (n_cls,), dtype=jnp.float32) * 0.05

    out = esm_classifier(x, w1, b1, w2, b2)
    out = jax.block_until_ready(out)

    # Pure-f32 reference of the PyTorch forward pass (two un-folded layers).
    # Tolerance accounts for bf16 x / folded-weight rounding (f32 accumulate).
    ref = (x @ w1 + b1) @ w2 + b2

    assert out.shape == (batch, n_cls)
    assert jnp.allclose(out, ref, atol=1e-2, rtol=1e-2), (
        float(jnp.max(jnp.abs(out - ref))))

    print("KERNEL_OK")
</pallas_src>

<mosaic_0001>
module attributes {stable_mosaic.version = 11 : i64} {
  func.func @esm_classifier_kernel(%arg0: i32, %arg1: memref<8x128xf32, #tpu.memory_space<vmem>>, %arg2: memref<128x128xbf16, #tpu.memory_space<vmem>>, %arg3: memref<1x128xf32, #tpu.memory_space<vmem>>, %arg4: memref<8x128xf32, #tpu.memory_space<vmem>>) attributes {dimension_semantics = [#tpu.dimension_semantics<parallel>], iteration_bounds = array<i64: 1>, scalar_prefetch = 0 : i64, scratch_operands = 0 : i64, tpu.core_type = #tpu.core_type<tc>, window_params = [{transform_indices = @transform_0, window_bounds = array<i64: 8, 128>}, {pipeline_mode = #tpu.pipeline_mode<synchronous>, transform_indices = @transform_1, window_bounds = array<i64: 128, 128>}, {pipeline_mode = #tpu.pipeline_mode<synchronous>, transform_indices = @transform_2, window_bounds = array<i64: 1, 128>}, {transform_indices = @transform_3, window_bounds = array<i64: 8, 128>}]} {
    %c0 = arith.constant 0 : index
    %c0_0 = arith.constant 0 : index
    %0 = vector.load %arg1[%c0, %c0_0] : memref<8x128xf32, #tpu.memory_space<vmem>>, vector<8x128xf32>
    %1 = arith.truncf %0 : vector<8x128xf32> to vector<8x128xbf16>
    %c0_1 = arith.constant 0 : index
    %c0_2 = arith.constant 0 : index
    %2 = vector.load %arg2[%c0_1, %c0_2] : memref<128x128xbf16, #tpu.memory_space<vmem>>, vector<128x128xbf16>
    %cst = arith.constant dense<0.000000e+00> : vector<8x128xf32>
    %3 = tpu.matmul %1, %2, %cst {dimension_numbers = #tpu.dot_dimension_numbers<[1], [0], [0], [1], [0, 0, 1, 1], [], []>} : vector<8x128xbf16>, vector<128x128xbf16>, vector<8x128xf32> -> vector<8x128xf32>
    %c0_3 = arith.constant 0 : index
    %c0_4 = arith.constant 0 : index
    %4 = vector.load %arg3[%c0_3, %c0_4] : memref<1x128xf32, #tpu.memory_space<vmem>>, vector<1x128xf32>
    %5 = vector.broadcast %4 : vector<1x128xf32> to vector<8x128xf32>
    %6 = arith.addf %3, %5 : vector<8x128xf32>
    %c0_5 = arith.constant 0 : index
    %c0_6 = arith.constant 0 : index
    %7 = vector.load %arg4[%c0_5, %c0_6] : memref<8x128xf32, #tpu.memory_space<vmem>>, vector<8x128xf32>
    tpu.vector_store %arg4[%c0_5, %c0_6], %6 {strides = array<i32>} : memref<8x128xf32, #tpu.memory_space<vmem>>, vector<8x128xf32>,
    return
  }
  func.func @transform_0(%arg0: i32) -> (i32, i32) {
    %c0_i32 = arith.constant 0 : i32
    %c0_i32_0 = arith.constant 0 : i32
    return %arg0, %c0_i32 : i32, i32
  }
  func.func @transform_1(%arg0: i32) -> (i32, i32) {
    %c0_i32 = arith.constant 0 : i32
    %c0_i32_0 = arith.constant 0 : i32
    %c0_i32_1 = arith.constant 0 : i32
    return %c0_i32, %c0_i32_0 : i32, i32
  }
  func.func @transform_2(%arg0: i32) -> (i32, i32) {
    %c0_i32 = arith.constant 0 : i32
    %c0_i32_0 = arith.constant 0 : i32
    %c0_i32_1 = arith.constant 0 : i32
    return %c0_i32, %c0_i32_0 : i32, i32
  }
  func.func @transform_3(%arg0: i32) -> (i32, i32) {
    %c0_i32 = arith.constant 0 : i32
    %c0_i32_0 = arith.constant 0 : i32
    return %arg0, %c0_i32 : i32, i32
  }
}

</mosaic_0001>

<llo_original>
// kernel: tpu_custom_call.1
$region0: #{tpu_custom_call.1}
  #allocation0 [shape = 'u32[]', space=smem, size = 0x4, offset = 0x4, fixed_abs, tag = 'smem constant byte address 0x4 - core index']
  #allocation1 [shape = 'u32[144,128]{1,0:T(1,128)}', space=vmem, size = 0x12000, scoped, tag = 'internal scratch']
  %s0 = inlined_call_operand.hbm [shape: f32[8,128], index: 0, kind: input, shape index: {}]
  %s1 = inlined_call_operand.hbm [shape: bf16[128,128], index: 1, kind: input, shape index: {}]
  %s2 = inlined_call_operand.vmem [shape: f32[1,128], index: 2, kind: input, shape index: {}]
  %s3 = inlined_call_operand.hbm [shape: f32[8,128], index: 3, kind: output, shape index: {}]
  %s4 = sld [smem:[#allocation0]]
  $region30: #{tpu_custom_call.1} parent=0
    _
  %s6 = ssub.s32 1, %s4
  %s7 = scalar_select 0, %s6, %s4
  $region1: #{tpu_custom_call.1} parent=0
    #allocation2 [shape = 'u8[4096]{0}', space=vmem, size = 0x1000, scoped, tag = 'input window, operand 0, single buffered']
    #allocation3 [shape = 's32[1]{0}', space=sflag, size = 0x4, scoped, tag = 'scoped memory for tpu_custom_call.1']
    #allocation4 [shape = 's32[1]{0}', space=sflag, size = 0x4, scoped, tag = 'scoped memory for tpu_custom_call.1']
    #allocation5 [shape = 'u8[32768]{0}', space=vmem, size = 0x8000, scoped, tag = 'input window, operand 1, single buffered']
    #allocation6 [shape = 's32[1]{0}', space=sflag, size = 0x4, scoped, tag = 'scoped memory for tpu_custom_call.1']
    #allocation7 [shape = 'u8[4096]{0}', space=vmem, size = 0x1000, scoped, tag = 'output window, operand 0, single buffered']
    %8 = vsyncpa [#allocation3], 0
    %9 = vsyncpa [#allocation6], 0
    %10 = vsyncpa [#allocation4], 0
    // Predicated region
    $region2: #{tpu_custom_call.1} parent=1 // pred_check
      _
    $region3: #{tpu_custom_call.1} parent=1 // pred_check_branch
      %12 = sbr.rel (0) target = $region5
    $region4: #{tpu_custom_call.1} parent=1 // pred_region
      %s14 = ssub.s32 128, 128
      %15 = vsyncadd [#allocation3], %s14
      %s17 = sshll.u32 [#allocation2], 4
      %s18 = int_to_ptr.vmem [resolvable:$true] %s17
      %20 = dma.hbm_to_vmem [thread:$0]  %s0, 128, %s18, [#allocation3]
    $region5: #{tpu_custom_call.1} parent=1 // pred_fallthru
      _
    // Predicated region
    $region6: #{tpu_custom_call.1} parent=1 // pred_check
      _
    $region7: #{tpu_custom_call.1} parent=1 // pred_check_branch
      %22 = sbr.rel (0) target = $region9
    $region8: #{tpu_custom_call.1} parent=1 // pred_region
      %s24 = ssub.s32 1024, 1024
      %25 = vsyncadd [#allocation6], %s24
      %s26 = sshll.u32 [#allocation5], 4
      %s27 = int_to_ptr.vmem [resolvable:$true] %s26
      %32 = dma.hbm_to_vmem [thread:$0]  %s1, 1024, %s27, [#allocation6], 64, 64, 4
    $region9: #{tpu_custom_call.1} parent=1 // pred_fallthru
      _
    // Predicated region
    $region10: #{tpu_custom_call.1} parent=1 // pred_check
      _
    $region11: #{tpu_custom_call.1} parent=1 // pred_check_branch
      %34 = sbr.rel (0) target = $region13
    $region12: #{tpu_custom_call.1} parent=1 // pred_region
      _
    $region13: #{tpu_custom_call.1} parent=1 // pred_fallthru
      _
    // Predicated region
    $region14: #{tpu_custom_call.1} parent=1 // pred_check
      _
    $region15: #{tpu_custom_call.1} parent=1 // pred_check_branch
      %36 = sbr.rel (0) target = $region17
    $region16: #{tpu_custom_call.1} parent=1 // pred_region
      %37 = dma.done [#allocation3], 128
    $region17: #{tpu_custom_call.1} parent=1 // pred_fallthru
      _
    // Predicated region
    $region18: #{tpu_custom_call.1} parent=1 // pred_check
      _
    $region19: #{tpu_custom_call.1} parent=1 // pred_check_branch
      %39 = sbr.rel (0) target = $region21
    $region20: #{tpu_custom_call.1} parent=1 // pred_region
      %40 = dma.done [#allocation6], 1024
    $region21: #{tpu_custom_call.1} parent=1 // pred_fallthru
      _
    %v42 = vld [vmem:[#allocation2] sm:$0xff]
    %v43 = vpack.c.bf16 %v42, %v42
    %v44 = vld [vmem:[#allocation5] sm:$0xf]
    %v45 = vld [vmem:[#allocation5 + $0x4] sm:$0xf]
    %v46 = vld [vmem:[#allocation5 + $0x8] sm:$0xf]
    %v47 = vld [vmem:[#allocation5 + $0xc] sm:$0xf]
    %v48 = vld [vmem:[#allocation5 + $0x10] sm:$0xf]
    %v49 = vld [vmem:[#allocation5 + $0x14] sm:$0xf]
    %v50 = vld [vmem:[#allocation5 + $0x18] sm:$0xf]
    %v51 = vld [vmem:[#allocation5 + $0x1c] sm:$0xf]
    %v52 = vld [vmem:[#allocation5 + $0x20] sm:$0xf]
    %v53 = vld [vmem:[#allocation5 + $0x24] sm:$0xf]
    %v54 = vld [vmem:[#allocation5 + $0x28] sm:$0xf]
    %v55 = vld [vmem:[#allocation5 + $0x2c] sm:$0xf]
    %v56 = vld [vmem:[#allocation5 + $0x30] sm:$0xf]
    %v57 = vld [vmem:[#allocation5 + $0x34] sm:$0xf]
    %v58 = vld [vmem:[#allocation5 + $0x38] sm:$0xf]
    %v59 = vld [vmem:[#allocation5 + $0x3c] sm:$0xf]
    %v60 = vld [vmem:[%s2] sm:$0x1]
    %v62 = vlaneseq
    %v63 = vshrl.u32 %v62, 7
    %v64 = vsub.s32 0, %v63
    %v65 = vrot.slane %v60, %v64
    %v83 = vunpack.c.l.b16 %v44
    %v84 = vunpack.c.l.b16 %v45
    %v85 = vunpack.c.l.b16 %v46
    %v86 = vunpack.c.l.b16 %v47
    %v87 = vunpack.c.l.b16 %v48
    %v88 = vunpack.c.l.b16 %v49
    %v89 = vunpack.c.l.b16 %v50
    %v90 = vunpack.c.l.b16 %v51
    %v91 = vunpack.c.l.b16 %v52
    %v92 = vunpack.c.l.b16 %v53
    %v93 = vunpack.c.l.b16 %v54
    %v94 = vunpack.c.l.b16 %v55
    %v95 = vunpack.c.l.b16 %v56
    %v96 = vunpack.c.l.b16 %v57
    %v97 = vunpack.c.l.b16 %v58
    %v98 = vunpack.c.l.b16 %v59
    %v99 = vpack.c.b16 %v84, %v83
    %v100 = vpack.c.b16 %v86, %v85
    %v101 = vpack.c.b16 %v88, %v87
    %v102 = vpack.c.b16 %v90, %v89
    %v103 = vpack.c.b16 %v92, %v91
    %v104 = vpack.c.b16 %v94, %v93
    %v105 = vpack.c.b16 %v96, %v95
    %v106 = vpack.c.b16 %v98, %v97
    %115 = vmatprep.subr.bf16.mxu0 0
    %116 = vmatpush1.bf16.msra.mxu0 %v99
    %117 = vmatprep.subr.bf16.mxu0 0
    %118 = vmatpush1.bf16.msra.mxu0 %v100
    %119 = vmatprep.subr.bf16.mxu0 0
    %120 = vmatpush1.bf16.msra.mxu0 %v101
    %121 = vmatprep.subr.bf16.mxu0 0
    %122 = vmatpush1.bf16.msra.mxu0 %v102
    %123 = vmatprep.subr.bf16.mxu0 0
    %124 = vmatpush1.bf16.msra.mxu0 %v103
    %125 = vmatprep.subr.bf16.mxu0 0
    %126 = vmatpush1.bf16.msra.mxu0 %v104
    %127 = vmatprep.subr.bf16.mxu0 0
    %128 = vmatpush1.bf16.msra.mxu0 %v105
    %129 = vmatprep.subr.bf16.mxu0 0
    %130 = vmatpush1.bf16.msra.mxu0 %v106
    %131 = vmatprep.subr.bf16.mxu0 0
    %132 = vmatpush1.bf16.msra.mxu0 0
    %133 = vmatprep.subr.bf16.mxu0 0
    %134 = vmatpush1.bf16.msra.mxu0 0
    %135 = vmatprep.subr.bf16.mxu0 0
    %136 = vmatpush1.bf16.msra.mxu0 0
    %137 = vmatprep.subr.bf16.mxu0 0
    %138 = vmatpush1.bf16.msra.mxu0 0
    %139 = vmatprep.subr.bf16.mxu0 0
    %140 = vmatpush1.bf16.msra.mxu0 0
    %141 = vmatprep.subr.bf16.mxu0 0
    %142 = vmatpush1.bf16.msra.mxu0 0
    %143 = vmatprep.subr.bf16.mxu0 0
    %144 = vmatpush1.bf16.msra.mxu0 0
    %145 = vmatprep.subr.bf16.mxu0 0
    %146 = vmatpush1.bf16.msra.mxu0 0
    %147 = vmatprep.mubr.bf16.mxu0 0
    %148 = vmatmul.mubr.bf16.gmra.mrb[0].mxu0 %v43
    %v149 = vpop.f32.mrb[0].mxu0
    %v150 = vadd.f32 %v65, %v149
    %v151 = vpop.f32.mrb[0].mxu0
    %v152 = vpop.f32.mrb[0].mxu0
    %v153 = vpop.f32.mrb[0].mxu0
    %154 = vdwg.mxu0
    %155 = vst [vmem:[#allocation7] sm:$0xff] %v150
    // Predicated region
    $region22: #{tpu_custom_call.1} parent=1 // pred_check
      _
    $region23: #{tpu_custom_call.1} parent=1 // pred_check_branch
      %157 = sbr.rel (0) target = $region25
    $region24: #{tpu_custom_call.1} parent=1 // pred_region
      %s159 = ssub.s32 128, 128
      %160 = vsyncadd [#allocation4], %s159
      %s162 = sshll.u32 [#allocation7], 4
      %s163 = int_to_ptr.vmem [resolvable:$true] %s162
      %165 = dma.vmem_to_hbm [thread:$0]  %s163, 128, %s3, [#allocation4]
    $region25: #{tpu_custom_call.1} parent=1 // pred_fallthru
      _
    // Predicated region
    $region26: #{tpu_custom_call.1} parent=1 // pred_check
      _
    $region27: #{tpu_custom_call.1} parent=1 // pred_check_branch
      %167 = sbr.rel (0) target = $region29
    $region28: #{tpu_custom_call.1} parent=1 // pred_region
      %168 = dma.done [#allocation4], 128
    $region29: #{tpu_custom_call.1} parent=1 // pred_fallthru
      _
    %169 = vsyncpa [#allocation3], 1
    %170 = vsyncpa [#allocation6], 1
    %171 = vsyncpa [#allocation4], 1

</llo_original>
